<compile_context>
chip_gen: v7x
topology: tpu7x:2x2x1
jax: 0.10.0
libtpu: 0.0.40
codegen_flags: <defaults>
</compile_context>

<pallas_src>
import math

import jax
import jax.numpy as jnp
from jax import lax
from jax.experimental import pallas as pl
from jax.experimental.pallas import tpu as pltpu


def _make_cp_kernel(n_inputs: int, batch_first: bool, mxu_dtype):
    """Kernel closure for `n_inputs` input feature matrices.

    Ref layout: U0, U1..Un, X1..Xn, out.
    """

    def _cast(v):
        return v.astype(mxu_dtype) if mxu_dtype is not None else v

    def kernel(*refs):
        u_refs = refs[: n_inputs + 1]
        x_refs = refs[n_inputs + 1 : 2 * n_inputs + 1]
        out_ref = refs[2 * n_inputs + 1]

        if not batch_first:
            # UX = prod_i (U_{i+1}^T @ X_i) -> (rank, TB).
            # Contraction on dim 0 of U: the transpose stays inside the MXU
            # push instead of an explicit XLU relayout.
            ux = None
            for i in range(n_inputs):
                t = lax.dot_general(
                    _cast(u_refs[i + 1][...]),
                    _cast(x_refs[i][...]),
                    dimension_numbers=(((0,), (0,)), ((), ())),
                    preferred_element_type=jnp.float32,
                )
                ux = t if ux is None else ux * t
            # Z = U0 @ UX -> (d_out, TB)
            z = lax.dot_general(
                _cast(u_refs[0][...]),
                _cast(ux),
                dimension_numbers=(((1,), (0,)), ((), ())),
                preferred_element_type=jnp.float32,
            )
        else:
            # Batch-major path: X_i is (TB, d_i), output is (TB, d_out).
            # UX_bf = prod_i (X_i @ U_{i+1}) -> (TB, rank)  ==  (U^T X^T)^T
            ux = None
            for i in range(n_inputs):
                t = lax.dot_general(
                    _cast(x_refs[i][...]),
                    _cast(u_refs[i + 1][...]),
                    dimension_numbers=(((1,), (0,)), ((), ())),
                    preferred_element_type=jnp.float32,
                )
                ux = t if ux is None else ux * t
            # Z_bf = UX_bf @ U0^T -> (TB, d_out)
            z = lax.dot_general(
                _cast(ux),
                _cast(u_refs[0][...]),
                dimension_numbers=(((1,), (1,)), ((), ())),
                preferred_element_type=jnp.float32,
            )

        out_ref[...] = z.astype(out_ref.dtype)

    return kernel


def _pick_batch_tile(batch: int, target: int = 512) -> int:
    """Pick a lane-dense batch tile: a multiple of 128 dividing `batch`,
    falling back to the full batch extent (always a legal block shape)."""
    if batch < 128:
        return batch
    tb = min(target, (batch // 128) * 128)
    while tb >= 128:
        if batch % tb == 0:
            return tb
        tb -= 128
    return batch


def cp_forward(
    U_matrices,
    X_matrices,
    *,
    batch_first: bool = False,
    batch_tile: int | None = None,
    use_bf16_mxu: bool = False,
):
    """Pallas implementation of CP.forward.

    U_matrices: list of (full_tensor_dims[i], rank) arrays, length n_modes.
    X_matrices: list of length n_modes - 1.
        batch_first=False: X_i has shape (d_i, B), output is (d_out, B).
        batch_first=True : X_i has shape (B, d_i), output is (B, d_out).
    """
    n_inputs = len(X_matrices)
    if n_inputs == 0:
        raise ValueError("CP forward requires at least one input feature matrix.")
    assert len(U_matrices) == n_inputs + 1

    d_out, rank = U_matrices[0].shape
    feat_dims = [u.shape[0] for u in U_matrices[1:]]
    batch = X_matrices[0].shape[0] if batch_first else X_matrices[0].shape[1]
    out_dtype = X_matrices[0].dtype

    tb = batch_tile if batch_tile is not None else _pick_batch_tile(batch)
    assert batch % tb == 0, "batch tile must divide the batch dimension"
    num_tiles = batch // tb

    mxu_dtype = jnp.bfloat16 if use_bf16_mxu else None
    kernel = _make_cp_kernel(n_inputs, batch_first, mxu_dtype)

    # U factors: full-array blocks with a constant block index -> resident in
    # VMEM across the whole batch grid (DMA'd once).
    u_specs = [pl.BlockSpec(u.shape, lambda b: (0, 0)) for u in U_matrices]

    if batch_first:
        x_specs = [pl.BlockSpec((tb, d), lambda b: (b, 0)) for d in feat_dims]
        out_spec = pl.BlockSpec((tb, d_out), lambda b: (b, 0))
        out_shape = jax.ShapeDtypeStruct((batch, d_out), out_dtype)
    else:
        x_specs = [pl.BlockSpec((d, tb), lambda b: (0, b)) for d in feat_dims]
        out_spec = pl.BlockSpec((d_out, tb), lambda b: (0, b))
        out_shape = jax.ShapeDtypeStruct((d_out, batch), out_dtype)

    # Advisory cost estimate so XLA can schedule around the custom call.
    itemsize = jnp.dtype(out_dtype).itemsize
    flops = 2 * batch * rank * (sum(feat_dims) + d_out)
    bytes_accessed = itemsize * (
        sum(d * rank for d in [d_out] + feat_dims)
        + batch * sum(feat_dims)
        + batch * d_out
    )
    cost = pl.CostEstimate(
        flops=flops, transcendentals=0, bytes_accessed=bytes_accessed
    )

    grid_spec = pltpu.PrefetchScalarGridSpec(
        num_scalar_prefetch=0,
        grid=(num_tiles,),
        in_specs=u_specs + x_specs,
        out_specs=out_spec,
    )

    return pl.pallas_call(
        kernel,
        out_shape=out_shape,
        grid_spec=grid_spec,
        compiler_params=pltpu.CompilerParams(
            dimension_semantics=("parallel",),
        ),
        cost_estimate=cost,
    )(*U_matrices, *X_matrices)


def _xavier_uniform(key, shape, dtype=jnp.float32):
    fan_in, fan_out = shape[0], shape[1]
    limit = math.sqrt(6.0 / (fan_in + fan_out))
    return jax.random.uniform(key, shape, dtype, minval=-limit, maxval=limit)


def _reference_cp(U_matrices, X_matrices, batch_first=False):
    if batch_first:
        X_matrices = [x.T for x in X_matrices]
    ux = 1.0
    for i in range(len(X_matrices)):
        ux = ux * (U_matrices[i + 1].T @ X_matrices[i])
    z = U_matrices[0] @ ux
    return z.T if batch_first else z


if __name__ == "__main__":
    # full_tensor_dims = [d_out, d1, d2], rank
    d_out, d1, d2 = 32, 16, 24
    rank = 16
    full_tensor_dims = [d_out, d1, d2]

    key = jax.random.PRNGKey(0)
    keys = jax.random.split(key, len(full_tensor_dims) + 2)

    # deterministic xavier-init factor matrices U_i : (full_tensor_dims[i], rank)
    U_matrices = [
        _xavier_uniform(keys[i], (full_tensor_dims[i], rank))
        for i in range(len(full_tensor_dims))
    ]

    # --- small case (B=8), batch_first=False: full-extent block, single step ---
    batch = 8
    X1 = jax.random.normal(keys[-2], (d1, batch), dtype=jnp.float32)
    X2 = jax.random.normal(keys[-1], (d2, batch), dtype=jnp.float32)
    X_matrices = [X1, X2]

    z = jax.block_until_ready(cp_forward(U_matrices, X_matrices, batch_first=False))
    z_ref = _reference_cp(U_matrices, X_matrices, batch_first=False)
    assert z.shape == (d_out, batch)
    assert jnp.allclose(z, z_ref, atol=1e-5, rtol=1e-5)

    # --- larger case (B=1024): exercises the lane-dense batch-tiled grid ---
    batch_l = 1024
    kl = jax.random.split(jax.random.PRNGKey(1), 2)
    XL = [
        jax.random.normal(kl[0], (d1, batch_l), dtype=jnp.float32),
        jax.random.normal(kl[1], (d2, batch_l), dtype=jnp.float32),
    ]
    zl = jax.block_until_ready(cp_forward(U_matrices, XL, batch_first=False))
    zl_ref = _reference_cp(U_matrices, XL, batch_first=False)
    assert zl.shape == (d_out, batch_l)
    assert jnp.allclose(zl, zl_ref, atol=1e-4, rtol=1e-4)

    # --- batch_first=True handled natively (no wrapper HBM transposes) ---
    XB = [x.T for x in XL]
    zb = jax.block_until_ready(cp_forward(U_matrices, XB, batch_first=True))
    zb_ref = _reference_cp(U_matrices, XB, batch_first=True)
    assert zb.shape == (batch_l, d_out)
    assert jnp.allclose(zb, zb_ref, atol=1e-4, rtol=1e-4)

    print("KERNEL_OK")
</pallas_src>

<mosaic_0001>
module attributes {stable_mosaic.version = 11 : i64} {
  func.func @kernel(%arg0: i32, %arg1: memref<32x16xf32, #tpu.memory_space<vmem>>, %arg2: memref<16x16xf32, #tpu.memory_space<vmem>>, %arg3: memref<24x16xf32, #tpu.memory_space<vmem>>, %arg4: memref<16x8xf32, #tpu.memory_space<vmem>>, %arg5: memref<24x8xf32, #tpu.memory_space<vmem>>, %arg6: memref<32x8xf32, #tpu.memory_space<vmem>>) attributes {dimension_semantics = [#tpu.dimension_semantics<parallel>], iteration_bounds = array<i64: 1>, scalar_prefetch = 0 : i64, scratch_operands = 0 : i64, tpu.core_type = #tpu.core_type<tc>, window_params = [{pipeline_mode = #tpu.pipeline_mode<synchronous>, transform_indices = @transform_0, window_bounds = array<i64: 32, 16>}, {pipeline_mode = #tpu.pipeline_mode<synchronous>, transform_indices = @transform_1, window_bounds = array<i64: 16, 16>}, {pipeline_mode = #tpu.pipeline_mode<synchronous>, transform_indices = @transform_2, window_bounds = array<i64: 24, 16>}, {transform_indices = @transform_3, window_bounds = array<i64: 16, 8>}, {transform_indices = @transform_4, window_bounds = array<i64: 24, 8>}, {transform_indices = @transform_5, window_bounds = array<i64: 32, 8>}]} {
    %c0 = arith.constant 0 : index
    %c0_0 = arith.constant 0 : index
    %0 = vector.load %arg2[%c0, %c0_0] : memref<16x16xf32, #tpu.memory_space<vmem>>, vector<16x16xf32>
    %c0_1 = arith.constant 0 : index
    %c0_2 = arith.constant 0 : index
    %1 = vector.load %arg4[%c0_1, %c0_2] : memref<16x8xf32, #tpu.memory_space<vmem>>, vector<16x8xf32>
    %cst = arith.constant dense<0.000000e+00> : vector<16x8xf32>
    %2 = tpu.matmul %0, %1, %cst {dimension_numbers = #tpu.dot_dimension_numbers<[0], [0], [1], [1], [0, 1, 1, 1], [], []>} : vector<16x16xf32>, vector<16x8xf32>, vector<16x8xf32> -> vector<16x8xf32>
    %c0_3 = arith.constant 0 : index
    %c0_4 = arith.constant 0 : index
    %3 = vector.load %arg3[%c0_3, %c0_4] : memref<24x16xf32, #tpu.memory_space<vmem>>, vector<24x16xf32>
    %c0_5 = arith.constant 0 : index
    %c0_6 = arith.constant 0 : index
    %4 = vector.load %arg5[%c0_5, %c0_6] : memref<24x8xf32, #tpu.memory_space<vmem>>, vector<24x8xf32>
    %cst_7 = arith.constant dense<0.000000e+00> : vector<16x8xf32>
    %5 = tpu.matmul %3, %4, %cst_7 {dimension_numbers = #tpu.dot_dimension_numbers<[0], [0], [1], [1], [0, 1, 1, 1], [], []>} : vector<24x16xf32>, vector<24x8xf32>, vector<16x8xf32> -> vector<16x8xf32>
    %6 = arith.mulf %2, %5 : vector<16x8xf32>
    %c0_8 = arith.constant 0 : index
    %c0_9 = arith.constant 0 : index
    %7 = vector.load %arg1[%c0_8, %c0_9] : memref<32x16xf32, #tpu.memory_space<vmem>>, vector<32x16xf32>
    %cst_10 = arith.constant dense<0.000000e+00> : vector<32x8xf32>
    %8 = tpu.matmul %7, %6, %cst_10 {dimension_numbers = #tpu.dot_dimension_numbers<[1], [0], [0], [1], [0, 0, 1, 1], [], []>} : vector<32x16xf32>, vector<16x8xf32>, vector<32x8xf32> -> vector<32x8xf32>
    %c0_11 = arith.constant 0 : index
    %c0_12 = arith.constant 0 : index
    %9 = vector.load %arg6[%c0_11, %c0_12] : memref<32x8xf32, #tpu.memory_space<vmem>>, vector<32x8xf32>
    tpu.vector_store %arg6[%c0_11, %c0_12], %8 {strides = array<i32>} : memref<32x8xf32, #tpu.memory_space<vmem>>, vector<32x8xf32>,
    return
  }
  func.func @transform_0(%arg0: i32) -> (i32, i32) {
    %c0_i32 = arith.constant 0 : i32
    %c0_i32_0 = arith.constant 0 : i32
    %c0_i32_1 = arith.constant 0 : i32
    return %c0_i32, %c0_i32_0 : i32, i32
  }
  func.func @transform_1(%arg0: i32) -> (i32, i32) {
    %c0_i32 = arith.constant 0 : i32
    %c0_i32_0 = arith.constant 0 : i32
    %c0_i32_1 = arith.constant 0 : i32
    return %c0_i32, %c0_i32_0 : i32, i32
  }
  func.func @transform_2(%arg0: i32) -> (i32, i32) {
    %c0_i32 = arith.constant 0 : i32
    %c0_i32_0 = arith.constant 0 : i32
    %c0_i32_1 = arith.constant 0 : i32
    return %c0_i32, %c0_i32_0 : i32, i32
  }
  func.func @transform_3(%arg0: i32) -> (i32, i32) {
    %c0_i32 = arith.constant 0 : i32
    %c0_i32_0 = arith.constant 0 : i32
    return %c0_i32, %arg0 : i32, i32
  }
  func.func @transform_4(%arg0: i32) -> (i32, i32) {
    %c0_i32 = arith.constant 0 : i32
    %c0_i32_0 = arith.constant 0 : i32
    return %c0_i32, %arg0 : i32, i32
  }
  func.func @transform_5(%arg0: i32) -> (i32, i32) {
    %c0_i32 = arith.constant 0 : i32
    %c0_i32_0 = arith.constant 0 : i32
    return %c0_i32, %arg0 : i32, i32
  }
}

</mosaic_0001>

<llo_original>
// kernel: tpu_custom_call.1
$region0: #{tpu_custom_call.1}
  #allocation0 [shape = 'u32[]', space=smem, size = 0x4, offset = 0x4, fixed_abs, tag = 'smem constant byte address 0x4 - core index']
  #allocation1 [shape = 'u32[144,128]{1,0:T(1,128)}', space=vmem, size = 0x12000, scoped, tag = 'internal scratch']
  %s0 = inlined_call_operand.vmem [shape: f32[32,16], index: 0, kind: input, shape index: {}]
  %s1 = inlined_call_operand.vmem [shape: f32[16,16], index: 1, kind: input, shape index: {}]
  %s2 = inlined_call_operand.vmem [shape: f32[24,16], index: 2, kind: input, shape index: {}]
  %s3 = inlined_call_operand.vmem [shape: f32[16,8], index: 3, kind: input, shape index: {}]
  %s4 = inlined_call_operand.vmem [shape: f32[24,8], index: 4, kind: input, shape index: {}]
  %s5 = inlined_call_operand.vmem [shape: f32[32,8], index: 5, kind: output, shape index: {}]
  %s6 = sld [smem:[#allocation0]]
  $region30: #{tpu_custom_call.1} parent=0
    _
  %s8 = ssub.s32 1, %s6
  %s9 = scalar_select 0, %s8, %s6
  // Predicated region
  $region2: #{tpu_custom_call.1} parent=0 // pred_check
    _
  $region3: #{tpu_custom_call.1} parent=0 // pred_check_branch
    %11 = sbr.rel (0) target = $region5
  $region4: #{tpu_custom_call.1} parent=0 // pred_region
    _
  $region5: #{tpu_custom_call.1} parent=0 // pred_fallthru
    _
  // Predicated region
  $region6: #{tpu_custom_call.1} parent=0 // pred_check
    _
  $region7: #{tpu_custom_call.1} parent=0 // pred_check_branch
    %13 = sbr.rel (0) target = $region9
  $region8: #{tpu_custom_call.1} parent=0 // pred_region
    _
  $region9: #{tpu_custom_call.1} parent=0 // pred_fallthru
    _
  // Predicated region
  $region10: #{tpu_custom_call.1} parent=0 // pred_check
    _
  $region11: #{tpu_custom_call.1} parent=0 // pred_check_branch
    %15 = sbr.rel (0) target = $region13
  $region12: #{tpu_custom_call.1} parent=0 // pred_region
    _
  $region13: #{tpu_custom_call.1} parent=0 // pred_fallthru
    _
  // Predicated region
  $region14: #{tpu_custom_call.1} parent=0 // pred_check
    _
  $region15: #{tpu_custom_call.1} parent=0 // pred_check_branch
    %17 = sbr.rel (0) target = $region17
  $region16: #{tpu_custom_call.1} parent=0 // pred_region
    _
  $region17: #{tpu_custom_call.1} parent=0 // pred_fallthru
    _
  // Predicated region
  $region18: #{tpu_custom_call.1} parent=0 // pred_check
    _
  $region19: #{tpu_custom_call.1} parent=0 // pred_check_branch
    %19 = sbr.rel (0) target = $region21
  $region20: #{tpu_custom_call.1} parent=0 // pred_region
    _
  $region21: #{tpu_custom_call.1} parent=0 // pred_fallthru
    _
  %v20 = vld [vmem:[%s1] sm:$0xff]
  %v21 = vld [vmem:[%s1 + $0x8] sm:$0xff]
  %v22 = vld [vmem:[%s3] sm:$0xff]
  %v23 = vld [vmem:[%s3 + $0x8] sm:$0xff]
  %24 = vxpose.xlu0.b32.start [1/16] %v20, 128
  %25 = vxpose.xlu0.b32.cont [2/16] %v21, 128
  %26 = vxpose.xlu0.b32.cont [3/16] 0.0, 128
  %27 = vxpose.xlu0.b32.cont [4/16] 0.0, 128
  %28 = vxpose.xlu0.b32.cont [5/16] 0.0, 128
  %29 = vxpose.xlu0.b32.cont [6/16] 0.0, 128
  %30 = vxpose.xlu0.b32.cont [7/16] 0.0, 128
  %31 = vxpose.xlu0.b32.cont [8/16] 0.0, 128
  %32 = vxpose.xlu0.b32.cont [9/16] 0.0, 128
  %33 = vxpose.xlu0.b32.cont [10/16] 0.0, 128
  %34 = vxpose.xlu0.b32.cont [11/16] 0.0, 128
  %35 = vxpose.xlu0.b32.cont [12/16] 0.0, 128
  %36 = vxpose.xlu0.b32.cont [13/16] 0.0, 128
  %37 = vxpose.xlu0.b32.cont [14/16] 0.0, 128
  %38 = vxpose.xlu0.b32.cont [15/16] 0.0, 128
  %39 = vxpose.xlu0.b32.end [16/16] 0.0, 128
  %v40 = vpop.trf.xlu0
  %v41 = vpop.trf.xlu0
  %v42 = vpop.trf.xlu0
  %v43 = vpop.trf.xlu0
  %v44 = vpop.trf.xlu0
  %v45 = vpop.trf.xlu0
  %v46 = vpop.trf.xlu0
  %v47 = vpop.trf.xlu0
  %v48 = vpop.trf.xlu0
  %v49 = vpop.trf.xlu0
  %v50 = vpop.trf.xlu0
  %v51 = vpop.trf.xlu0
  %v52 = vpop.trf.xlu0
  %v53 = vpop.trf.xlu0
  %v54 = vpop.trf.xlu0
  %v55 = vpop.trf.xlu0
  %vm56 = vcmask 130048
  %v58 = vsel %vm56, %v40, 0
  %v61 = vsel %vm56, %v41, 0
  %63 = vmatprep.subr.mxu0 0.0
  %64 = vmatpush1.msra.mxu0 %v22
  %65 = vmatprep.subr.mxu0 0.0
  %66 = vmatpush1.msra.mxu0 %v23
  %67 = vmatprep.subr.mxu0 0.0
  %68 = vmatpush1.msra.mxu0 0.0
  %69 = vmatprep.subr.mxu0 0.0
  %70 = vmatpush1.msra.mxu0 0.0
  %71 = vmatprep.subr.mxu0 0.0
  %72 = vmatpush1.msra.mxu0 0.0
  %73 = vmatprep.subr.mxu0 0.0
  %74 = vmatpush1.msra.mxu0 0.0
  %75 = vmatprep.subr.mxu0 0.0
  %76 = vmatpush1.msra.mxu0 0.0
  %77 = vmatprep.subr.mxu0 0.0
  %78 = vmatpush1.msra.mxu0 0.0
  %79 = vmatprep.subr.mxu0 0.0
  %80 = vmatpush1.msra.mxu0 0.0
  %81 = vmatprep.subr.mxu0 0.0
  %82 = vmatpush1.msra.mxu0 0.0
  %83 = vmatprep.subr.mxu0 0.0
  %84 = vmatpush1.msra.mxu0 0.0
  %85 = vmatprep.subr.mxu0 0.0
  %86 = vmatpush1.msra.mxu0 0.0
  %87 = vmatprep.subr.mxu0 0.0
  %88 = vmatpush1.msra.mxu0 0.0
  %89 = vmatprep.subr.mxu0 0.0
  %90 = vmatpush1.msra.mxu0 0.0
  %91 = vmatprep.subr.mxu0 0.0
  %92 = vmatpush1.msra.mxu0 0.0
  %93 = vmatprep.subr.mxu0 0.0
  %94 = vmatpush1.msra.mxu0 0.0
  %95 = vmatprep.subr.mxu0 0.0
  %96 = vmatpush1.msra.mxu0 0.0
  %97 = vmatprep.subr.mxu0 0.0
  %98 = vmatpush1.msra.mxu0 0.0
  %99 = vmatprep.subr.mxu0 0.0
  %100 = vmatpush1.msra.mxu0 0.0
  %101 = vmatprep.subr.mxu0 0.0
  %102 = vmatpush1.msra.mxu0 0.0
  %103 = vmatprep.subr.mxu0 0.0
  %104 = vmatpush1.msra.mxu0 0.0
  %105 = vmatprep.subr.mxu0 0.0
  %106 = vmatpush1.msra.mxu0 0.0
  %107 = vmatprep.subr.mxu0 0.0
  %108 = vmatpush1.msra.mxu0 0.0
  %109 = vmatprep.subr.mxu0 0.0
  %110 = vmatpush1.msra.mxu0 0.0
  %111 = vmatprep.subr.mxu0 0.0
  %112 = vmatpush1.msra.mxu0 0.0
  %113 = vmatprep.subr.mxu0 0.0
  %114 = vmatpush1.msra.mxu0 0.0
  %115 = vmatprep.subr.mxu0 0.0
  %116 = vmatpush1.msra.mxu0 0.0
  %117 = vmatprep.subr.mxu0 0.0
  %118 = vmatpush1.msra.mxu0 0.0
  %119 = vmatprep.subr.mxu0 0.0
  %120 = vmatpush1.msra.mxu0 0.0
  %121 = vmatprep.subr.mxu0 0.0
  %122 = vmatpush1.msra.mxu0 0.0
  %123 = vmatprep.subr.mxu0 0.0
  %124 = vmatpush1.msra.mxu0 0.0
  %125 = vmatprep.subr.mxu0 0.0
  %126 = vmatpush1.msra.mxu0 0.0
  %127 = vmatprep.mubr.f32.mxu0 0.0
  %128 = vmatmul.mubr.f32.gmra.mrb[0].mxu0 %v58
  %v129 = vpop.f32.mrb[0].mxu0
  %v130 = vadd.f32 0.0, %v129
  %v131 = vpop.f32.mrb[0].mxu0
  %132 = vmatprep.mubr.f32.mxu0 0.0
  %133 = vmatmul.mubr.f32.gmra.mrb[0].mxu0 %v61
  %v134 = vpop.f32.mrb[0].mxu0
  %v135 = vadd.f32 0.0, %v134
  %v136 = vpop.f32.mrb[0].mxu0
  %137 = vdwg.mxu0
  %v138 = vld [vmem:[%s2] sm:$0xff]
  %v139 = vld [vmem:[%s2 + $0x8] sm:$0xff]
  %v140 = vld [vmem:[%s2 + $0x10] sm:$0xff]
  %v141 = vld [vmem:[%s4] sm:$0xff]
  %v142 = vld [vmem:[%s4 + $0x8] sm:$0xff]
  %v143 = vld [vmem:[%s4 + $0x10] sm:$0xff]
  %144 = vxpose.xlu0.b32.start [1/16] %v138, 128
  %145 = vxpose.xlu0.b32.cont [2/16] %v139, 128
  %146 = vxpose.xlu0.b32.cont [3/16] %v140, 128
  %147 = vxpose.xlu0.b32.cont [4/16] 0.0, 128
  %148 = vxpose.xlu0.b32.cont [5/16] 0.0, 128
  %149 = vxpose.xlu0.b32.cont [6/16] 0.0, 128
  %150 = vxpose.xlu0.b32.cont [7/16] 0.0, 128
  %151 = vxpose.xlu0.b32.cont [8/16] 0.0, 128
  %152 = vxpose.xlu0.b32.cont [9/16] 0.0, 128
  %153 = vxpose.xlu0.b32.cont [10/16] 0.0, 128
  %154 = vxpose.xlu0.b32.cont [11/16] 0.0, 128
  %155 = vxpose.xlu0.b32.cont [12/16] 0.0, 128
  %156 = vxpose.xlu0.b32.cont [13/16] 0.0, 128
  %157 = vxpose.xlu0.b32.cont [14/16] 0.0, 128
  %158 = vxpose.xlu0.b32.cont [15/16] 0.0, 128
  %159 = vxpose.xlu0.b32.end [16/16] 0.0, 128
  %v160 = vpop.trf.xlu0
  %v161 = vpop.trf.xlu0
  %v162 = vpop.trf.xlu0
  %v163 = vpop.trf.xlu0
  %v164 = vpop.trf.xlu0
  %v165 = vpop.trf.xlu0
  %v166 = vpop.trf.xlu0
  %v167 = vpop.trf.xlu0
  %v168 = vpop.trf.xlu0
  %v169 = vpop.trf.xlu0
  %v170 = vpop.trf.xlu0
  %v171 = vpop.trf.xlu0
  %v172 = vpop.trf.xlu0
  %v173 = vpop.trf.xlu0
  %v174 = vpop.trf.xlu0
  %v175 = vpop.trf.xlu0
  %vm176 = vcmask 195584
  %v178 = vsel %vm176, %v160, 0
  %v181 = vsel %vm176, %v161, 0
  %183 = vmatprep.subr.mxu0 0.0
  %184 = vmatpush1.msra.mxu0 %v141
  %185 = vmatprep.subr.mxu0 0.0
  %186 = vmatpush1.msra.mxu0 %v142
  %187 = vmatprep.subr.mxu0 0.0
  %188 = vmatpush1.msra.mxu0 %v143
  %189 = vmatprep.subr.mxu0 0.0
  %190 = vmatpush1.msra.mxu0 0.0
  %191 = vmatprep.subr.mxu0 0.0
  %192 = vmatpush1.msra.mxu0 0.0
  %193 = vmatprep.subr.mxu0 0.0
  %194 = vmatpush1.msra.mxu0 0.0
  %195 = vmatprep.subr.mxu0 0.0
  %196 = vmatpush1.msra.mxu0 0.0
  %197 = vmatprep.subr.mxu0 0.0
  %198 = vmatpush1.msra.mxu0 0.0
  %199 = vmatprep.subr.mxu0 0.0
  %200 = vmatpush1.msra.mxu0 0.0
  %201 = vmatprep.subr.mxu0 0.0
  %202 = vmatpush1.msra.mxu0 0.0
  %203 = vmatprep.subr.mxu0 0.0
  %204 = vmatpush1.msra.mxu0 0.0
  %205 = vmatprep.subr.mxu0 0.0
  %206 = vmatpush1.msra.mxu0 0.0
  %207 = vmatprep.subr.mxu0 0.0
  %208 = vmatpush1.msra.mxu0 0.0
  %209 = vmatprep.subr.mxu0 0.0
  %210 = vmatpush1.msra.mxu0 0.0
  %211 = vmatprep.subr.mxu0 0.0
  %212 = vmatpush1.msra.mxu0 0.0
  %213 = vmatprep.subr.mxu0 0.0
  %214 = vmatpush1.msra.mxu0 0.0
  %215 = vmatprep.subr.mxu0 0.0
  %216 = vmatpush1.msra.mxu0 0.0
  %217 = vmatprep.subr.mxu0 0.0
  %218 = vmatpush1.msra.mxu0 0.0
  %219 = vmatprep.subr.mxu0 0.0
  %220 = vmatpush1.msra.mxu0 0.0
  %221 = vmatprep.subr.mxu0 0.0
  %222 = vmatpush1.msra.mxu0 0.0
  %223 = vmatprep.subr.mxu0 0.0
  %224 = vmatpush1.msra.mxu0 0.0
  %225 = vmatprep.subr.mxu0 0.0
  %226 = vmatpush1.msra.mxu0 0.0
  %227 = vmatprep.subr.mxu0 0.0
  %228 = vmatpush1.msra.mxu0 0.0
  %229 = vmatprep.subr.mxu0 0.0
  %230 = vmatpush1.msra.mxu0 0.0
  %231 = vmatprep.subr.mxu0 0.0
  %232 = vmatpush1.msra.mxu0 0.0
  %233 = vmatprep.subr.mxu0 0.0
  %234 = vmatpush1.msra.mxu0 0.0
  %235 = vmatprep.subr.mxu0 0.0
  %236 = vmatpush1.msra.mxu0 0.0
  %237 = vmatprep.subr.mxu0 0.0
  %238 = vmatpush1.msra.mxu0 0.0
  %239 = vmatprep.subr.mxu0 0.0
  %240 = vmatpush1.msra.mxu0 0.0
  %241 = vmatprep.subr.mxu0 0.0
  %242 = vmatpush1.msra.mxu0 0.0
  %243 = vmatprep.subr.mxu0 0.0
  %244 = vmatpush1.msra.mxu0 0.0
  %245 = vmatprep.subr.mxu0 0.0
  %246 = vmatpush1.msra.mxu0 0.0
  %247 = vmatprep.mubr.f32.mxu0 0.0
  %248 = vmatmul.mubr.f32.gmra.mrb[0].mxu0 %v178
  %v249 = vpop.f32.mrb[0].mxu0
  %v250 = vadd.f32 0.0, %v249
  %v251 = vpop.f32.mrb[0].mxu0
  %252 = vmatprep.mubr.f32.mxu0 0.0
  %253 = vmatmul.mubr.f32.gmra.mrb[0].mxu0 %v181
  %v254 = vpop.f32.mrb[0].mxu0
  %v255 = vadd.f32 0.0, %v254
  %v256 = vpop.f32.mrb[0].mxu0
  %257 = vdwg.mxu0
  %v258 = vmul.f32 %v130, %v250
  %v259 = vmul.f32 %v135, %v255
  %v260 = vld [vmem:[%s0] sm:$0xff]
  %v261 = vld [vmem:[%s0 + $0x8] sm:$0xff]
  %v262 = vld [vmem:[%s0 + $0x10] sm:$0xff]
  %v263 = vld [vmem:[%s0 + $0x18] sm:$0xff]
  %v265 = vsel %vm56, %v260, 0
  %v268 = vsel %vm56, %v261, 0
  %v271 = vsel %vm56, %v262, 0
  %v274 = vsel %vm56, %v263, 0
  %276 = vmatprep.subr.mxu0 0.0
  %277 = vmatpush1.msra.mxu0 %v258
  %278 = vmatprep.subr.mxu0 0.0
  %279 = vmatpush1.msra.mxu0 %v259
  %280 = vmatprep.subr.mxu0 0.0
  %281 = vmatpush1.msra.mxu0 0.0
  %282 = vmatprep.subr.mxu0 0.0
  %283 = vmatpush1.msra.mxu0 0.0
  %284 = vmatprep.subr.mxu0 0.0
  %285 = vmatpush1.msra.mxu0 0.0
  %286 = vmatprep.subr.mxu0 0.0
  %287 = vmatpush1.msra.mxu0 0.0
  %288 = vmatprep.subr.mxu0 0.0
  %289 = vmatpush1.msra.mxu0 0.0
  %290 = vmatprep.subr.mxu0 0.0
  %291 = vmatpush1.msra.mxu0 0.0
  %292 = vmatprep.subr.mxu0 0.0
  %293 = vmatpush1.msra.mxu0 0.0
  %294 = vmatprep.subr.mxu0 0.0
  %295 = vmatpush1.msra.mxu0 0.0
  %296 = vmatprep.subr.mxu0 0.0
  %297 = vmatpush1.msra.mxu0 0.0
  %298 = vmatprep.subr.mxu0 0.0
  %299 = vmatpush1.msra.mxu0 0.0
  %300 = vmatprep.subr.mxu0 0.0
  %301 = vmatpush1.msra.mxu0 0.0
  %302 = vmatprep.subr.mxu0 0.0
  %303 = vmatpush1.msra.mxu0 0.0
  %304 = vmatprep.subr.mxu0 0.0
  %305 = vmatpush1.msra.mxu0 0.0
  %306 = vmatprep.subr.mxu0 0.0
  %307 = vmatpush1.msra.mxu0 0.0
  %308 = vmatprep.subr.mxu0 0.0
  %309 = vmatpush1.msra.mxu0 0.0
  %310 = vmatprep.subr.mxu0 0.0
  %311 = vmatpush1.msra.mxu0 0.0
  %312 = vmatprep.subr.mxu0 0.0
  %313 = vmatpush1.msra.mxu0 0.0
  %314 = vmatprep.subr.mxu0 0.0
  %315 = vmatpush1.msra.mxu0 0.0
  %316 = vmatprep.subr.mxu0 0.0
  %317 = vmatpush1.msra.mxu0 0.0
  %318 = vmatprep.subr.mxu0 0.0
  %319 = vmatpush1.msra.mxu0 0.0
  %320 = vmatprep.subr.mxu0 0.0
  %321 = vmatpush1.msra.mxu0 0.0
  %322 = vmatprep.subr.mxu0 0.0
  %323 = vmatpush1.msra.mxu0 0.0
  %324 = vmatprep.subr.mxu0 0.0
  %325 = vmatpush1.msra.mxu0 0.0
  %326 = vmatprep.subr.mxu0 0.0
  %327 = vmatpush1.msra.mxu0 0.0
  %328 = vmatprep.subr.mxu0 0.0
  %329 = vmatpush1.msra.mxu0 0.0
  %330 = vmatprep.subr.mxu0 0.0
  %331 = vmatpush1.msra.mxu0 0.0
  %332 = vmatprep.subr.mxu0 0.0
  %333 = vmatpush1.msra.mxu0 0.0
  %334 = vmatprep.subr.mxu0 0.0
  %335 = vmatpush1.msra.mxu0 0.0
  %336 = vmatprep.subr.mxu0 0.0
  %337 = vmatpush1.msra.mxu0 0.0
  %338 = vmatprep.subr.mxu0 0.0
  %339 = vmatpush1.msra.mxu0 0.0
  %340 = vmatprep.mubr.f32.mxu0 0.0
  %341 = vmatmul.mubr.f32.gmra.mrb[0].mxu0 %v265
  %v342 = vpop.f32.mrb[0].mxu0
  %v343 = vadd.f32 0.0, %v342
  %v344 = vpop.f32.mrb[0].mxu0
  %345 = vmatprep.mubr.f32.mxu0 0.0
  %346 = vmatmul.mubr.f32.gmra.mrb[0].mxu0 %v268
  %v347 = vpop.f32.mrb[0].mxu0
  %v348 = vadd.f32 0.0, %v347
  %v349 = vpop.f32.mrb[0].mxu0
  %350 = vmatprep.mubr.f32.mxu0 0.0
  %351 = vmatmul.mubr.f32.gmra.mrb[0].mxu0 %v271
  %v352 = vpop.f32.mrb[0].mxu0
  %v353 = vadd.f32 0.0, %v352
  %v354 = vpop.f32.mrb[0].mxu0
  %355 = vmatprep.mubr.f32.mxu0 0.0
  %356 = vmatmul.mubr.f32.gmra.mrb[0].mxu0 %v274
  %v357 = vpop.f32.mrb[0].mxu0
  %v358 = vadd.f32 0.0, %v357
  %v359 = vpop.f32.mrb[0].mxu0
  %360 = vdwg.mxu0
  %vm361 = vcmask 64512
  %362 = vst.msk [vmem:[%s5] sm:$0xff] %vm361, %v343
  %363 = vst.msk [vmem:[%s5 + $0x8] sm:$0xff] %vm361, %v348
  %364 = vst.msk [vmem:[%s5 + $0x10] sm:$0xff] %vm361, %v353
  %365 = vst.msk [vmem:[%s5 + $0x18] sm:$0xff] %vm361, %v358
  // Predicated region
  $region22: #{tpu_custom_call.1} parent=0 // pred_check
    _
  $region23: #{tpu_custom_call.1} parent=0 // pred_check_branch
    %367 = sbr.rel (0) target = $region25
  $region24: #{tpu_custom_call.1} parent=0 // pred_region
    _
  $region25: #{tpu_custom_call.1} parent=0 // pred_fallthru
    _
  // Predicated region
  $region26: #{tpu_custom_call.1} parent=0 // pred_check
    _
  $region27: #{tpu_custom_call.1} parent=0 // pred_check_branch
    %369 = sbr.rel (0) target = $region29
  $region28: #{tpu_custom_call.1} parent=0 // pred_region
    _
  $region29: #{tpu_custom_call.1} parent=0 // pred_fallthru
    _

</llo_original>
